<compile_context>
chip_gen: v7x
topology: tpu7x:2x2x1
jax: 0.10.0
libtpu: 0.0.40
codegen_flags: <defaults>
</compile_context>

<pallas_src>
import functools

import jax
import jax.numpy as jnp
from jax.experimental import pallas as pl
from jax.experimental.pallas import tpu as pltpu

_LANE = 128


# ---------------- Pallas kernels (elementwise hot path) ----------------

def _sq_kernel(pred_ref, out_ref, *, cd):
    p = pred_ref[...].astype(cd)
    out_ref[...] = (p * p).astype(out_ref.dtype)


def _l2_kernel(pred_ref, gt_ref, out_ref, *, cd):
    d = gt_ref[...].astype(cd) - pred_ref[...].astype(cd)
    out_ref[...] = (d * d).astype(out_ref.dtype)


def _sq_w_kernel(pred_ref, w_ref, out_ref, *, cd):
    p = pred_ref[...].astype(cd)
    out_ref[...] = (p * p * w_ref[...].astype(cd)).astype(out_ref.dtype)


def _l2_w_kernel(pred_ref, gt_ref, w_ref, out_ref, *, cd):
    d = gt_ref[...].astype(cd) - pred_ref[...].astype(cd)
    out_ref[...] = (d * d * w_ref[...].astype(cd)).astype(out_ref.dtype)


def _sq_sw_kernel(pred_ref, w_ref, out_ref, *, cd):
    # w_ref is a (1, 1) f32 scalar living in SMEM.
    p = pred_ref[...].astype(cd)
    out_ref[...] = (p * p * w_ref[0, 0].astype(cd)).astype(out_ref.dtype)


def _l2_sw_kernel(pred_ref, gt_ref, w_ref, out_ref, *, cd):
    d = gt_ref[...].astype(cd) - pred_ref[...].astype(cd)
    out_ref[...] = (d * d * w_ref[0, 0].astype(cd)).astype(out_ref.dtype)


# ---------------- helpers ----------------

def _device_kind():
    try:
        return jax.devices()[0].device_kind.lower()
    except Exception:
        return ""


def _pick_width(n):
    """Widest lane-dense width (multiple of 128) dividing n, preferring widths
    that give >= 8 rows so each block fills full (8,128) vregs.
    Returns 0 if n is not a multiple of 128."""
    divisors = [w for w in (4096, 2048, 1024, 512, 256, 128) if n and n % w == 0]
    for w in divisors:
        if n // w >= 8:
            return w
    return divisors[-1] if divisors else 0


def _l2_jax(pred, gt, weights, w_scalar, out_dtype):
    """Plain-JAX fallback: tiny tensors (<128 elems) and <=127-element tails."""
    l2 = (gt - pred) ** 2 if gt is not None else pred ** 2
    if weights is not None:
        l2 = l2 * weights
    if w_scalar is not None:
        l2 = l2 * w_scalar.reshape(()).astype(l2.dtype)
    return l2.astype(out_dtype)


def _run_blocks(kernel, arrays2d, w_scalar, out_dtype, weighted, block_bytes):
    """Run the elementwise kernel on lane-dense (rows, width) slabs."""
    rows, width = arrays2d[0].shape

    itemsizes = [jnp.dtype(a.dtype).itemsize for a in arrays2d]
    itemsizes.append(jnp.dtype(out_dtype).itemsize)
    max_item = max(itemsizes)
    # The narrowest dtype packs the most rows per vreg -> its sublane multiple.
    sub_mult = max(8, 32 // min(itemsizes))

    tile_rows = max(sub_mult,
                    (block_bytes // (width * max_item)) // sub_mult * sub_mult)
    if rows > tile_rows:
        block_rows = tile_rows
    elif rows >= 2 * sub_mult:
        # Fits in one tile: still split in two so the "parallel" grid axis can
        # shard across v7x's two TensorCores (no effect on v5e/v6e).
        half = (rows + 1) // 2
        block_rows = ((half + sub_mult - 1) // sub_mult) * sub_mult
    else:
        block_rows = rows  # block == full dim is always legal
    grid = (pl.cdiv(rows, block_rows),)

    spec = pl.BlockSpec((block_rows, width), lambda i: (i, 0))
    in_specs = [spec] * len(arrays2d)
    operands = list(arrays2d)
    if w_scalar is not None:
        operands.append(w_scalar)
        in_specs.append(pl.BlockSpec(memory_space=pltpu.MemorySpace.SMEM))

    n = rows * width
    flops = (3 if weighted else 2) * n
    bytes_accessed = sum(int(a.size) * jnp.dtype(a.dtype).itemsize
                         for a in arrays2d)
    bytes_accessed += n * jnp.dtype(out_dtype).itemsize

    return pl.pallas_call(
        kernel,
        out_shape=jax.ShapeDtypeStruct((rows, width), out_dtype),
        grid_spec=pltpu.PrefetchScalarGridSpec(
            num_scalar_prefetch=0,
            grid=grid,
            in_specs=in_specs,
            out_specs=spec,
        ),
        compiler_params=pltpu.CompilerParams(
            dimension_semantics=("parallel",),
            vmem_limit_bytes=32 * 1024 * 1024,
        ),
        cost_estimate=pl.CostEstimate(
            flops=flops, transcendentals=0, bytes_accessed=bytes_accessed),
    )(*operands)


# ---------------- wrapper ----------------

def l2_pallas(pred, gt=None, weights=None, mask=None):
    """Pallas implementation of L2.forward (same semantics as the PyTorch module)."""
    pred = jnp.asarray(pred)
    gt = jnp.asarray(gt) if gt is not None else None
    weights = jnp.asarray(weights) if weights is not None else None

    orig_shape = pred.shape
    n = pred.size

    kind = _device_kind()
    # ~1 MiB per operand on v5e (16 MiB scoped-VMEM default), ~2 MiB elsewhere.
    block_bytes = (1 << 20) if "v5" in kind else (2 << 20)

    # Result dtype (0-d weights behave like scalars for promotion, as in torch).
    promo = [pred.dtype]
    if gt is not None:
        promo.append(gt.dtype)
    if weights is not None and weights.size > 1:
        promo.append(weights.dtype)
    out_dtype = jnp.result_type(*promo)

    # Broadcasting: scalar weights stay out of HBM (SMEM), other mismatches
    # are broadcast to pred's shape.
    if gt is not None and gt.shape != pred.shape:
        gt = jnp.broadcast_to(gt, pred.shape)
    w_scalar = None
    if weights is not None:
        if weights.size == 1:
            w_scalar = weights.astype(jnp.float32).reshape(1, 1)
            weights = None
        elif weights.shape != pred.shape:
            # TODO(synk): per-channel/low-rank weights still materialize a
            # broadcast; a repeating index_map could stream them instead.
            weights = jnp.broadcast_to(weights, pred.shape)

    weighted = weights is not None or w_scalar is not None

    # Compute dtype: bf16 math is fine on v6e/v7x (bf16 VALUs); widen on v5e.
    if jnp.dtype(out_dtype) == jnp.bfloat16 and "v5" not in kind:
        cd = jnp.bfloat16
    else:
        cd = jnp.float32

    if gt is not None and weights is not None:
        kernel = functools.partial(_l2_w_kernel, cd=cd)
    elif gt is not None and w_scalar is not None:
        kernel = functools.partial(_l2_sw_kernel, cd=cd)
    elif gt is not None:
        kernel = functools.partial(_l2_kernel, cd=cd)
    elif weights is not None:
        kernel = functools.partial(_sq_w_kernel, cd=cd)
    elif w_scalar is not None:
        kernel = functools.partial(_sq_sw_kernel, cd=cd)
    else:
        kernel = functools.partial(_sq_kernel, cd=cd)

    width = _pick_width(n)
    if width:
        m, tail = n, 0
    else:
        # numel not a multiple of 128: kernel on the aligned prefix, tiny tail
        # (<128 elements) in plain JAX -- no full-array pad copy.
        width = _LANE
        m = (n // _LANE) * _LANE
        tail = n - m

    if m == 0:
        # Fewer than 128 elements: not worth a kernel launch.
        l2 = _l2_jax(pred, gt, weights, w_scalar, out_dtype)
    else:
        rows = m // width
        pred_f = pred.reshape(-1)
        gt_f = gt.reshape(-1) if gt is not None else None
        w_f = weights.reshape(-1) if weights is not None else None

        def slab(x):
            return x if tail == 0 else x[:m]

        arrays2d = [slab(pred_f).reshape(rows, width)]
        if gt_f is not None:
            arrays2d.append(slab(gt_f).reshape(rows, width))
        if w_f is not None:
            arrays2d.append(slab(w_f).reshape(rows, width))

        out2d = _run_blocks(kernel, arrays2d, w_scalar, out_dtype, weighted,
                            block_bytes)
        out_f = out2d.reshape(-1)
        if tail:
            tail_out = _l2_jax(
                pred_f[m:],
                gt_f[m:] if gt_f is not None else None,
                w_f[m:] if w_f is not None else None,
                w_scalar, out_dtype)
            out_f = jnp.concatenate([out_f, tail_out])
        l2 = out_f.reshape(orig_shape)

    if mask is not None:
        # TODO(synk): boolean compaction has a data-dependent output shape; it
        # has no Pallas/TPU equivalent and only works outside jax.jit.
        l2 = l2[mask]
    return l2


# ---------------- demo / check ----------------

if __name__ == "__main__":
    key = jax.random.PRNGKey(0)
    k1, k2, k3, k4 = jax.random.split(key, 4)

    shape = (2, 4, 16, 16)  # NCHW
    pred = jax.random.normal(k1, shape, dtype=jnp.float32)
    gt = jax.random.normal(k2, shape, dtype=jnp.float32)
    weights = jax.random.uniform(k3, shape, dtype=jnp.float32)
    mask = jax.random.bernoulli(k4, 0.5, shape)

    # 1) full path: (gt - pred)^2 * weights
    out = jax.block_until_ready(l2_pallas(pred, gt, weights))
    assert jnp.allclose(out, (gt - pred) ** 2 * weights, atol=1e-6), "weighted L2 mismatch"

    # 2) gt=None path: pred^2
    out2 = jax.block_until_ready(l2_pallas(pred))
    assert jnp.allclose(out2, pred ** 2, atol=1e-6), "pred^2 mismatch"

    # 3) gt only (no weights): (gt - pred)^2
    out3 = jax.block_until_ready(l2_pallas(pred, gt))
    assert jnp.allclose(out3, (gt - pred) ** 2, atol=1e-6), "unweighted L2 mismatch"

    # 4) scalar weight (stays in SMEM, no materialized broadcast)
    w_s = jnp.asarray(0.25, dtype=jnp.float32)
    out4 = jax.block_until_ready(l2_pallas(pred, gt, w_s))
    assert jnp.allclose(out4, (gt - pred) ** 2 * 0.25, atol=1e-6), "scalar-weight L2 mismatch"

    # 5) numel not a multiple of 128 (kernel on prefix + plain-JAX tail)
    p5 = jax.random.normal(k1, (7, 37), dtype=jnp.float32)
    g5 = jax.random.normal(k2, (7, 37), dtype=jnp.float32)
    out5 = jax.block_until_ready(l2_pallas(p5, g5))
    assert jnp.allclose(out5, (g5 - p5) ** 2, atol=1e-6), "tail-path L2 mismatch"

    # 6) masked path (eager only)
    out6 = jax.block_until_ready(l2_pallas(pred, gt, weights, mask))
    ref6 = ((gt - pred) ** 2 * weights)[mask]
    assert out6.shape == ref6.shape and jnp.allclose(out6, ref6, atol=1e-6), \
        "masked L2 mismatch"

    print("KERNEL_OK")
</pallas_src>

<mosaic_0001>
module attributes {stable_mosaic.version = 11 : i64} {
  func.func @_l2_w_kernel(%arg0: i32, %arg1: memref<8x256xf32, #tpu.memory_space<vmem>>, %arg2: memref<8x256xf32, #tpu.memory_space<vmem>>, %arg3: memref<8x256xf32, #tpu.memory_space<vmem>>, %arg4: memref<8x256xf32, #tpu.memory_space<vmem>>) attributes {dimension_semantics = [#tpu.dimension_semantics<parallel>], iteration_bounds = array<i64: 1>, scalar_prefetch = 0 : i64, scratch_operands = 0 : i64, tpu.core_type = #tpu.core_type<tc>, window_params = [{transform_indices = @transform_0, window_bounds = array<i64: 8, 256>}, {transform_indices = @transform_1, window_bounds = array<i64: 8, 256>}, {transform_indices = @transform_2, window_bounds = array<i64: 8, 256>}, {transform_indices = @transform_3, window_bounds = array<i64: 8, 256>}]} {
    %c0 = arith.constant 0 : index
    %c0_0 = arith.constant 0 : index
    %0 = vector.load %arg2[%c0, %c0_0] : memref<8x256xf32, #tpu.memory_space<vmem>>, vector<8x256xf32>
    %c0_1 = arith.constant 0 : index
    %c0_2 = arith.constant 0 : index
    %1 = vector.load %arg1[%c0_1, %c0_2] : memref<8x256xf32, #tpu.memory_space<vmem>>, vector<8x256xf32>
    %2 = arith.subf %0, %1 : vector<8x256xf32>
    %3 = arith.mulf %2, %2 : vector<8x256xf32>
    %c0_3 = arith.constant 0 : index
    %c0_4 = arith.constant 0 : index
    %4 = vector.load %arg3[%c0_3, %c0_4] : memref<8x256xf32, #tpu.memory_space<vmem>>, vector<8x256xf32>
    %5 = arith.mulf %3, %4 : vector<8x256xf32>
    %c0_5 = arith.constant 0 : index
    %c0_6 = arith.constant 0 : index
    %6 = vector.load %arg4[%c0_5, %c0_6] : memref<8x256xf32, #tpu.memory_space<vmem>>, vector<8x256xf32>
    tpu.vector_store %arg4[%c0_5, %c0_6], %5 {strides = array<i32>} : memref<8x256xf32, #tpu.memory_space<vmem>>, vector<8x256xf32>,
    return
  }
  func.func @transform_0(%arg0: i32) -> (i32, i32) {
    %c0_i32 = arith.constant 0 : i32
    %c0_i32_0 = arith.constant 0 : i32
    return %arg0, %c0_i32 : i32, i32
  }
  func.func @transform_1(%arg0: i32) -> (i32, i32) {
    %c0_i32 = arith.constant 0 : i32
    %c0_i32_0 = arith.constant 0 : i32
    return %arg0, %c0_i32 : i32, i32
  }
  func.func @transform_2(%arg0: i32) -> (i32, i32) {
    %c0_i32 = arith.constant 0 : i32
    %c0_i32_0 = arith.constant 0 : i32
    return %arg0, %c0_i32 : i32, i32
  }
  func.func @transform_3(%arg0: i32) -> (i32, i32) {
    %c0_i32 = arith.constant 0 : i32
    %c0_i32_0 = arith.constant 0 : i32
    return %arg0, %c0_i32 : i32, i32
  }
}

</mosaic_0001>

<llo_original>
// kernel: tpu_custom_call.1
$region0: #{tpu_custom_call.1}
  #allocation0 [shape = 'u32[]', space=smem, size = 0x4, offset = 0x4, fixed_abs, tag = 'smem constant byte address 0x4 - core index']
  #allocation1 [shape = 'u32[144,128]{1,0:T(1,128)}', space=vmem, size = 0x12000, scoped, tag = 'internal scratch']
  %s0 = inlined_call_operand.hbm [shape: f32[8,256], index: 0, kind: input, shape index: {}]
  %s1 = inlined_call_operand.hbm [shape: f32[8,256], index: 1, kind: input, shape index: {}]
  %s2 = inlined_call_operand.hbm [shape: f32[8,256], index: 2, kind: input, shape index: {}]
  %s3 = inlined_call_operand.hbm [shape: f32[8,256], index: 3, kind: output, shape index: {}]
  %s4 = sld [smem:[#allocation0]]
  $region34: #{tpu_custom_call.1} parent=0
    _
  %s6 = ssub.s32 1, %s4
  %s7 = scalar_select 0, %s6, %s4
  $region1: #{tpu_custom_call.1} parent=0
    #allocation2 [shape = 'u8[8192]{0}', space=vmem, size = 0x2000, scoped, tag = 'input window, operand 0, single buffered']
    #allocation3 [shape = 's32[1]{0}', space=sflag, size = 0x4, scoped, tag = 'scoped memory for tpu_custom_call.1']
    #allocation4 [shape = 's32[1]{0}', space=sflag, size = 0x4, scoped, tag = 'scoped memory for tpu_custom_call.1']
    #allocation5 [shape = 'u8[8192]{0}', space=vmem, size = 0x2000, scoped, tag = 'input window, operand 1, single buffered']
    #allocation6 [shape = 's32[1]{0}', space=sflag, size = 0x4, scoped, tag = 'scoped memory for tpu_custom_call.1']
    #allocation7 [shape = 'u8[8192]{0}', space=vmem, size = 0x2000, scoped, tag = 'input window, operand 2, single buffered']
    #allocation8 [shape = 'u8[8192]{0}', space=vmem, size = 0x2000, scoped, tag = 'output window, operand 0, single buffered']
    %8 = vsyncpa [#allocation3], 0
    %9 = vsyncpa [#allocation6], 0
    %10 = vsyncpa [#allocation4], 0
    // Predicated region
    $region2: #{tpu_custom_call.1} parent=1 // pred_check
      _
    $region3: #{tpu_custom_call.1} parent=1 // pred_check_branch
      %12 = sbr.rel (0) target = $region5
    $region4: #{tpu_custom_call.1} parent=1 // pred_region
      %s14 = ssub.s32 256, 256
      %15 = vsyncadd [#allocation3], %s14
      %s17 = sshll.u32 [#allocation2], 4
      %s18 = int_to_ptr.vmem [resolvable:$true] %s17
      %20 = dma.hbm_to_vmem [thread:$0]  %s0, 256, %s18, [#allocation3]
    $region5: #{tpu_custom_call.1} parent=1 // pred_fallthru
      _
    // Predicated region
    $region6: #{tpu_custom_call.1} parent=1 // pred_check
      _
    $region7: #{tpu_custom_call.1} parent=1 // pred_check_branch
      %22 = sbr.rel (0) target = $region9
    $region8: #{tpu_custom_call.1} parent=1 // pred_region
      %s24 = ssub.s32 256, 256
      %25 = vsyncadd [#allocation6], %s24
      %s27 = sshll.u32 [#allocation5], 4
      %s28 = int_to_ptr.vmem [resolvable:$true] %s27
      %30 = dma.hbm_to_vmem [thread:$0]  %s1, 256, %s28, [#allocation6]
    $region9: #{tpu_custom_call.1} parent=1 // pred_fallthru
      _
    // Predicated region
    $region10: #{tpu_custom_call.1} parent=1 // pred_check
      _
    $region11: #{tpu_custom_call.1} parent=1 // pred_check_branch
      %32 = sbr.rel (0) target = $region13
    $region12: #{tpu_custom_call.1} parent=1 // pred_region
      %s34 = ssub.s32 256, 256
      %35 = vsyncadd [#allocation6], %s34
      %s37 = sshll.u32 [#allocation7], 4
      %s38 = int_to_ptr.vmem [resolvable:$true] %s37
      %40 = dma.hbm_to_vmem [thread:$0]  %s2, 256, %s38, [#allocation6]
    $region13: #{tpu_custom_call.1} parent=1 // pred_fallthru
      _
    // Predicated region
    $region14: #{tpu_custom_call.1} parent=1 // pred_check
      _
    $region15: #{tpu_custom_call.1} parent=1 // pred_check_branch
      %42 = sbr.rel (0) target = $region17
    $region16: #{tpu_custom_call.1} parent=1 // pred_region
      %43 = dma.done [#allocation3], 256
    $region17: #{tpu_custom_call.1} parent=1 // pred_fallthru
      _
    // Predicated region
    $region18: #{tpu_custom_call.1} parent=1 // pred_check
      _
    $region19: #{tpu_custom_call.1} parent=1 // pred_check_branch
      %45 = sbr.rel (0) target = $region21
    $region20: #{tpu_custom_call.1} parent=1 // pred_region
      %46 = dma.done [#allocation6], 256
    $region21: #{tpu_custom_call.1} parent=1 // pred_fallthru
      _
    // Predicated region
    $region22: #{tpu_custom_call.1} parent=1 // pred_check
      _
    $region23: #{tpu_custom_call.1} parent=1 // pred_check_branch
      %48 = sbr.rel (0) target = $region25
    $region24: #{tpu_custom_call.1} parent=1 // pred_region
      %49 = dma.done [#allocation6], 256
    $region25: #{tpu_custom_call.1} parent=1 // pred_fallthru
      _
    %v50 = vld [vmem:[#allocation5] sm:$0xff]
    %v51 = vld [vmem:[#allocation5 + $0x8] sm:$0xff]
    %v52 = vld [vmem:[#allocation2] sm:$0xff]
    %v53 = vld [vmem:[#allocation2 + $0x8] sm:$0xff]
    %v54 = vsub.f32 %v50, %v52
    %v55 = vsub.f32 %v51, %v53
    %v56 = vmul.f32 %v54, %v54
    %v57 = vmul.f32 %v55, %v55
    %v58 = vld [vmem:[#allocation7] sm:$0xff]
    %v59 = vld [vmem:[#allocation7 + $0x8] sm:$0xff]
    %v60 = vmul.f32 %v56, %v58
    %v61 = vmul.f32 %v57, %v59
    %62 = vst [vmem:[#allocation8] sm:$0xff] %v60
    %63 = vst [vmem:[#allocation8 + $0x8] sm:$0xff] %v61
    // Predicated region
    $region26: #{tpu_custom_call.1} parent=1 // pred_check
      _
    $region27: #{tpu_custom_call.1} parent=1 // pred_check_branch
      %65 = sbr.rel (0) target = $region29
    $region28: #{tpu_custom_call.1} parent=1 // pred_region
      %s67 = ssub.s32 256, 256
      %68 = vsyncadd [#allocation4], %s67
      %s70 = sshll.u32 [#allocation8], 4
      %s71 = int_to_ptr.vmem [resolvable:$true] %s70
      %73 = dma.vmem_to_hbm [thread:$0]  %s71, 256, %s3, [#allocation4]
    $region29: #{tpu_custom_call.1} parent=1 // pred_fallthru
      _
    // Predicated region
    $region30: #{tpu_custom_call.1} parent=1 // pred_check
      _
    $region31: #{tpu_custom_call.1} parent=1 // pred_check_branch
      %75 = sbr.rel (0) target = $region33
    $region32: #{tpu_custom_call.1} parent=1 // pred_region
      %76 = dma.done [#allocation4], 256
    $region33: #{tpu_custom_call.1} parent=1 // pred_fallthru
      _
    %77 = vsyncpa [#allocation3], 1
    %78 = vsyncpa [#allocation6], 1
    %79 = vsyncpa [#allocation4], 1

</llo_original>
